<compile_context>
chip_gen: v5e
topology: v5e:2x2
jax: 0.10.0
libtpu: 0.0.40
codegen_flags: <defaults>
</compile_context>

<pallas_src>
import jax
import jax.numpy as jnp
from jax.experimental import pallas as pl
from jax.experimental.pallas import tpu as pltpu

_LANE = 128


def _round_up(x, m):
    return ((x + m - 1) // m) * m


def _sublane_multiple(dtype):
    # Min tile is (8,128) for 4-byte, (16,128) for 2-byte, (32,128) for 1-byte.
    return max(8, 32 // jnp.dtype(dtype).itemsize)


def _vmem_capacity_bytes():
    try:
        return int(pltpu.get_tpu_info().vmem_capacity_bytes)
    except Exception:
        return 64 * 1024 * 1024  # conservative: v7x per-TensorCore VMEM


def _num_tensorcores():
    try:
        d = jax.devices()[0]
        for attr in ("num_cores", "core_count", "num_cores_per_chip"):
            v = getattr(d, attr, None)
            if isinstance(v, int) and v > 0:
                return v
    except Exception:
        pass
    return 1


def _divisor_tiles(dim):
    """Multiples of 128 that evenly divide `dim` (itself a multiple of 128), descending."""
    units = dim // _LANE
    out = [d * _LANE for d in range(units, 0, -1) if units % d == 0]
    return out or [_LANE]


def _select_tiles(batch, kp, ep, x_dtype, w_dtype, out_dtype, vmem_cap, num_cores):
    x_item = jnp.dtype(x_dtype).itemsize
    w_item = jnp.dtype(w_dtype).itemsize
    o_item = jnp.dtype(out_dtype).itemsize
    sub = max(_sublane_multiple(x_dtype), _sublane_multiple(out_dtype))

    # Double-buffered working-set budget; leave headroom for compiler scratch.
    budget = int(vmem_cap * 0.55)

    # Small-batch policy: single M tile -> weight table streamed exactly once.
    if batch <= 256:
        tm = _round_up(batch, sub)
    else:
        tm = _round_up(min(512, batch), sub)
    mp = _round_up(batch, tm)
    grid_m = mp // tm

    tk_opts = _divisor_tiles(kp)   # descending, keep exact divisibility so the
    tn_opts = _divisor_tiles(ep)   # init-padded weight never needs re-padding
    ni = ki = 0

    def usage(ni_, ki_):
        tn_, tk_ = tn_opts[ni_], tk_opts[ki_]
        b = 2 * (tm * tk_ * x_item + tk_ * tn_ * w_item + tm * tn_ * o_item)
        if tk_ < kp:  # accumulator scratch only needed when K is split
            b += tm * tn_ * 4
        return b

    while usage(ni, ki) > budget:
        can_n = ni + 1 < len(tn_opts)
        can_k = ki + 1 < len(tk_opts)
        if not (can_n or can_k):
            break
        # Shrink the larger dim first; prefer keeping tk == full K (fast path).
        if can_n and (not can_k or tn_opts[ni] >= tk_opts[ki]):
            ni += 1
        else:
            ki += 1

    tn, tk = tn_opts[ni], tk_opts[ki]

    # Megacore (2 TCs): make sure there are >= 2 parallel tiles so the second
    # TensorCore is not idle.  Irrelevant (and skipped) on 1-TC chips.
    if num_cores >= 2 and grid_m == 1 and ep // tn < 2 and ep >= 2 * _LANE:
        for cand in _divisor_tiles(ep):
            if ep // cand >= 2:
                tn = cand
                break

    return tm, tn, tk, mp


def _embedding_matmul_kernel_single_k(x_ref, wt_ref, o_ref):
    # Whole K fits in one block: no accumulator, no init/epilogue passes.
    o_ref[...] = jnp.dot(
        x_ref[...], wt_ref[...], preferred_element_type=jnp.float32
    ).astype(o_ref.dtype)


def _embedding_matmul_kernel_acc(x_ref, wt_ref, o_ref, acc_ref):
    @pl.when(pl.program_id(2) == 0)
    def _():
        acc_ref[...] = jnp.zeros_like(acc_ref)

    acc_ref[...] += jnp.dot(
        x_ref[...], wt_ref[...], preferred_element_type=jnp.float32
    )

    @pl.when(pl.program_id(2) == pl.num_programs(2) - 1)
    def _():
        o_ref[...] = acc_ref[...].astype(o_ref.dtype)


def prepare_embedding_weight(weight, dtype=None):
    """One-time (init/load-time) conversion of the PyTorch Linear weight.

    [E, K] -> transposed [K, E], padded to [Kp, Ep] (multiples of 128), and
    optionally cast (e.g. jnp.bfloat16 halves HBM table traffic; the kernel
    still accumulates in f32).  Hoisting the transpose AND the pad here keeps
    full-table HBM rewrites off the per-call hot path.
    """
    w = jnp.asarray(weight)
    if dtype is not None:
        w = w.astype(dtype)
    e, k = w.shape
    wt = w.T
    kp, ep = _round_up(k, _LANE), _round_up(e, _LANE)
    if (kp, ep) != (k, e):
        wt = jnp.pad(wt, ((0, kp - k), (0, ep - e)))
    return wt


def entity_embedding(x, wt, *, embedding_dim=None, out_dtype=None):
    """Forward pass of EntityEmbedding: x @ W^T.

    args:
      x             -- [batch, input_dim]
      wt            -- [Kp, Ep] pre-transposed, 128-padded weight from
                       prepare_embedding_weight (Kp = round_up(input_dim, 128))
      embedding_dim -- true (unpadded) output dim; defaults to wt.shape[1]

    returns: [batch, embedding_dim]
    """
    batch, input_dim = x.shape
    kp, ep = wt.shape
    if embedding_dim is None:
        embedding_dim = ep
    assert kp == _round_up(input_dim, _LANE), (
        "weight must be prepared with prepare_embedding_weight for this input_dim")
    assert embedding_dim <= ep

    out_dtype = jnp.dtype(out_dtype or x.dtype)
    vmem_cap = _vmem_capacity_bytes()
    num_cores = _num_tensorcores()
    tm, tn, tk, mp = _select_tiles(
        batch, kp, ep, x.dtype, wt.dtype, out_dtype, vmem_cap, num_cores)

    # Per-call pad of x only (the small operand); the table was padded at init.
    if (mp, kp) != (batch, input_dim):
        x = jnp.pad(x, ((0, mp - batch), (0, kp - input_dim)))

    grid_m, grid_n, grid_k = mp // tm, ep // tn, kp // tk

    x_item = jnp.dtype(x.dtype).itemsize
    w_item = jnp.dtype(wt.dtype).itemsize
    cost = pl.CostEstimate(
        flops=2 * mp * ep * kp,
        # Actual HBM traffic: x re-read per N tile, W re-read per M tile.
        bytes_accessed=(grid_n * mp * kp * x_item
                        + grid_m * kp * ep * w_item
                        + mp * ep * out_dtype.itemsize),
        transcendentals=0,
    )

    # Raised scoped-VMEM limit: ~48 MiB on v7x (64 MiB phys), 96 MiB on v5e/v6e.
    vmem_limit = int(min(vmem_cap * 3 // 4, 96 * 1024 * 1024))

    if grid_k == 1:
        grid_spec = pltpu.PrefetchScalarGridSpec(
            num_scalar_prefetch=0,
            grid=(grid_m, grid_n),
            in_specs=[
                pl.BlockSpec((tm, tk), lambda i, j: (i, 0)),
                pl.BlockSpec((tk, tn), lambda i, j: (0, j)),
            ],
            out_specs=pl.BlockSpec((tm, tn), lambda i, j: (i, j)),
            scratch_shapes=[],
        )
        kernel = _embedding_matmul_kernel_single_k
        dims = ("parallel", "parallel")
    else:
        grid_spec = pltpu.PrefetchScalarGridSpec(
            num_scalar_prefetch=0,
            grid=(grid_m, grid_n, grid_k),
            in_specs=[
                pl.BlockSpec((tm, tk), lambda i, j, k: (i, k)),
                pl.BlockSpec((tk, tn), lambda i, j, k: (k, j)),
            ],
            out_specs=pl.BlockSpec((tm, tn), lambda i, j, k: (i, j)),
            scratch_shapes=[pltpu.VMEM((tm, tn), jnp.float32)],
        )
        kernel = _embedding_matmul_kernel_acc
        dims = ("parallel", "parallel", "arbitrary")

    out = pl.pallas_call(
        kernel,
        out_shape=jax.ShapeDtypeStruct((mp, ep), out_dtype),
        grid_spec=grid_spec,
        compiler_params=pltpu.CompilerParams(
            dimension_semantics=dims,
            vmem_limit_bytes=vmem_limit,
        ),
        cost_estimate=cost,
    )(x, wt)

    # No-op when batch / embedding_dim are already aligned to the padded sizes
    # (keep model-level dims 128-aligned to stay on the copy-free path).
    if (mp, ep) != (batch, embedding_dim):
        out = out[:batch, :embedding_dim]
    return out


def idx2vec(weight, idx):
    """EntityEmbedding.idx2vec on the original PyTorch-layout weight [E, K]."""
    return jnp.asarray(weight)[:, idx]


if __name__ == "__main__":
    key = jax.random.PRNGKey(0)
    k_x, k_w, k_x2, k_w2 = jax.random.split(key, 4)

    # --- Case 1: f32, small unaligned dims (exercises pad + slice path) ------
    batch, input_dim, embedding_dim = 8, 32, 64
    x = jax.random.normal(k_x, (batch, input_dim), dtype=jnp.float32)
    bound = 1.0 / (input_dim ** 0.5)
    weight = jax.random.uniform(
        k_w, (embedding_dim, input_dim), dtype=jnp.float32,
        minval=-bound, maxval=bound)

    wt = prepare_embedding_weight(weight)          # init-time transpose + pad
    out = jax.block_until_ready(entity_embedding(x, wt, embedding_dim=embedding_dim))
    ref = x @ weight.T
    assert out.shape == (batch, embedding_dim)
    assert jnp.allclose(out, ref, atol=1e-5, rtol=1e-5)

    # --- Case 2: bf16 table + inputs, 128-aligned dims (lane-dense, no slice,
    #     exercises dtype-aware (16,128) sublane rounding + grid_k==1 path) ---
    b2, k2, e2 = 16, 128, 256
    x2 = jax.random.normal(k_x2, (b2, k2), dtype=jnp.float32).astype(jnp.bfloat16)
    w2 = jax.random.uniform(
        k_w2, (e2, k2), dtype=jnp.float32,
        minval=-1.0 / (k2 ** 0.5), maxval=1.0 / (k2 ** 0.5))
    wt2 = prepare_embedding_weight(w2, dtype=jnp.bfloat16)
    out2 = jax.block_until_ready(entity_embedding(x2, wt2, embedding_dim=e2))
    ref2 = x2.astype(jnp.float32) @ wt2.astype(jnp.float32)
    assert out2.shape == (b2, e2)
    assert jnp.allclose(out2.astype(jnp.float32), ref2, atol=1e-2, rtol=1e-2)

    # idx2vec parity check.
    v = idx2vec(weight, 3)
    assert v.shape == (embedding_dim,)
    assert jnp.allclose(v, weight[:, 3])

    print("KERNEL_OK")
</pallas_src>

<mosaic_0001>
module attributes {stable_mosaic.version = 11 : i64} {
  func.func @_embedding_matmul_kernel_single_k(%arg0: i32, %arg1: i32, %arg2: memref<8x128xf32, #tpu.memory_space<vmem>>, %arg3: memref<128x128xf32, #tpu.memory_space<vmem>>, %arg4: memref<8x128xf32, #tpu.memory_space<vmem>>) attributes {dimension_semantics = [#tpu.dimension_semantics<parallel>, #tpu.dimension_semantics<parallel>], iteration_bounds = array<i64: 1, 1>, scalar_prefetch = 0 : i64, scratch_operands = 0 : i64, tpu.core_type = #tpu.core_type<tc>, window_params = [{transform_indices = @transform_0, window_bounds = array<i64: 8, 128>}, {transform_indices = @transform_1, window_bounds = array<i64: 128, 128>}, {transform_indices = @transform_2, window_bounds = array<i64: 8, 128>}]} {
    %c0 = arith.constant 0 : index
    %c0_0 = arith.constant 0 : index
    %0 = vector.load %arg2[%c0, %c0_0] : memref<8x128xf32, #tpu.memory_space<vmem>>, vector<8x128xf32>
    %c0_1 = arith.constant 0 : index
    %c0_2 = arith.constant 0 : index
    %1 = vector.load %arg3[%c0_1, %c0_2] : memref<128x128xf32, #tpu.memory_space<vmem>>, vector<128x128xf32>
    %cst = arith.constant dense<0.000000e+00> : vector<8x128xf32>
    %2 = tpu.matmul %0, %1, %cst {dimension_numbers = #tpu.dot_dimension_numbers<[1], [0], [0], [1], [0, 0, 1, 1], [], []>} : vector<8x128xf32>, vector<128x128xf32>, vector<8x128xf32> -> vector<8x128xf32>
    %c0_3 = arith.constant 0 : index
    %c0_4 = arith.constant 0 : index
    %3 = vector.load %arg4[%c0_3, %c0_4] : memref<8x128xf32, #tpu.memory_space<vmem>>, vector<8x128xf32>
    tpu.vector_store %arg4[%c0_3, %c0_4], %2 {strides = array<i32>} : memref<8x128xf32, #tpu.memory_space<vmem>>, vector<8x128xf32>,
    return
  }
  func.func @transform_0(%arg0: i32, %arg1: i32) -> (i32, i32) {
    %c0_i32 = arith.constant 0 : i32
    %c0_i32_0 = arith.constant 0 : i32
    return %arg0, %c0_i32 : i32, i32
  }
  func.func @transform_1(%arg0: i32, %arg1: i32) -> (i32, i32) {
    %c0_i32 = arith.constant 0 : i32
    %c0_i32_0 = arith.constant 0 : i32
    return %c0_i32, %arg1 : i32, i32
  }
  func.func @transform_2(%arg0: i32, %arg1: i32) -> (i32, i32) {
    %c0_i32 = arith.constant 0 : i32
    return %arg0, %arg1 : i32, i32
  }
}

</mosaic_0001>

<llo_original>
// kernel: tpu_custom_call.1
$region0: #{tpu_custom_call.1}
  #allocation0 [shape = 'u32[]', space=smem, size = 0x4, offset = 0x4, fixed_abs, tag = 'smem constant byte address 0x4 - core index']
  #allocation1 [shape = 'u32[72,128]{1,0:T(1,128)}', space=vmem, size = 0x9000, scoped, tag = 'internal scratch']
  %s0 = inlined_call_operand.hbm [shape: f32[8,128], index: 0, kind: input, shape index: {}]
  %s1 = inlined_call_operand.hbm [shape: f32[128,128], index: 1, kind: input, shape index: {}]
  %s2 = inlined_call_operand.hbm [shape: f32[8,128], index: 2, kind: output, shape index: {}]
  %s3 = sld [smem:[#allocation0]]
  $region26: #{tpu_custom_call.1} parent=0
    _
  %s5 = ssub.s32 1, %s3
  %s6 = scalar_select 0, %s5, %s3
  $region1: #{tpu_custom_call.1} parent=0
    #allocation2 [shape = 'u8[4096]{0}', space=vmem, size = 0x1000, scoped, tag = 'input window, operand 0, single buffered']
    #allocation3 [shape = 's32[1]{0}', space=sflag, size = 0x4, scoped, tag = 'scoped memory for tpu_custom_call.1']
    #allocation4 [shape = 's32[1]{0}', space=sflag, size = 0x4, scoped, tag = 'scoped memory for tpu_custom_call.1']
    #allocation5 [shape = 'u8[65536]{0}', space=vmem, size = 0x10000, scoped, tag = 'input window, operand 1, single buffered']
    #allocation6 [shape = 's32[1]{0}', space=sflag, size = 0x4, scoped, tag = 'scoped memory for tpu_custom_call.1']
    #allocation7 [shape = 'u8[4096]{0}', space=vmem, size = 0x1000, scoped, tag = 'output window, operand 0, single buffered']
    %7 = vsyncpa [#allocation3], 0
    %8 = vsyncpa [#allocation6], 0
    %9 = vsyncpa [#allocation4], 0
    // Predicated region
    $region2: #{tpu_custom_call.1} parent=1 // pred_check
      _
    $region3: #{tpu_custom_call.1} parent=1 // pred_check_branch
      %11 = sbr.rel (0) target = $region5
    $region4: #{tpu_custom_call.1} parent=1 // pred_region
      %13 = vsyncadd [#allocation3], 0
      %s15 = sshll.u32 %s0, 4
      %s16 = int_to_ptr.hbm [resolvable:$true] %s15
      %s17 = sshll.u32 [#allocation2], 4
      %s18 = int_to_ptr.vmem [resolvable:$true] %s17
      %20 = dma.hbm_to_vmem [thread:$0]  %s16, 128, %s18, [#allocation3]
    $region5: #{tpu_custom_call.1} parent=1 // pred_fallthru
      _
    // Predicated region
    $region6: #{tpu_custom_call.1} parent=1 // pred_check
      _
    $region7: #{tpu_custom_call.1} parent=1 // pred_check_branch
      %22 = sbr.rel (0) target = $region9
    $region8: #{tpu_custom_call.1} parent=1 // pred_region
      %24 = vsyncadd [#allocation6], 0
      %s25 = sshll.u32 %s1, 4
      %s26 = int_to_ptr.hbm [resolvable:$true] %s25
      %s27 = sshll.u32 [#allocation5], 4
      %s28 = int_to_ptr.vmem [resolvable:$true] %s27
      %33 = dma.hbm_to_vmem [thread:$0]  %s26, 2048, %s28, [#allocation6], 128, 128, 8
    $region9: #{tpu_custom_call.1} parent=1 // pred_fallthru
      _
    // Predicated region
    $region10: #{tpu_custom_call.1} parent=1 // pred_check
      _
    $region11: #{tpu_custom_call.1} parent=1 // pred_check_branch
      %35 = sbr.rel (0) target = $region13
    $region12: #{tpu_custom_call.1} parent=1 // pred_region
      %37 = dma.done [#allocation3], 128
    $region13: #{tpu_custom_call.1} parent=1 // pred_fallthru
      _
    // Predicated region
    $region14: #{tpu_custom_call.1} parent=1 // pred_check
      _
    $region15: #{tpu_custom_call.1} parent=1 // pred_check_branch
      %39 = sbr.rel (0) target = $region17
    $region16: #{tpu_custom_call.1} parent=1 // pred_region
      %41 = dma.done [#allocation6], 2048
    $region17: #{tpu_custom_call.1} parent=1 // pred_fallthru
      _
    %v42 = vld [vmem:[#allocation2] sm:$0xff]
    %v43 = vld [vmem:[#allocation5] sm:$0xff]
    %v44 = vld [vmem:[#allocation5 + $0x8] sm:$0xff]
    %v45 = vld [vmem:[#allocation5 + $0x10] sm:$0xff]
    %v46 = vld [vmem:[#allocation5 + $0x18] sm:$0xff]
    %v47 = vld [vmem:[#allocation5 + $0x20] sm:$0xff]
    %v48 = vld [vmem:[#allocation5 + $0x28] sm:$0xff]
    %v49 = vld [vmem:[#allocation5 + $0x30] sm:$0xff]
    %v50 = vld [vmem:[#allocation5 + $0x38] sm:$0xff]
    %v51 = vld [vmem:[#allocation5 + $0x40] sm:$0xff]
    %v52 = vld [vmem:[#allocation5 + $0x48] sm:$0xff]
    %v53 = vld [vmem:[#allocation5 + $0x50] sm:$0xff]
    %v54 = vld [vmem:[#allocation5 + $0x58] sm:$0xff]
    %v55 = vld [vmem:[#allocation5 + $0x60] sm:$0xff]
    %v56 = vld [vmem:[#allocation5 + $0x68] sm:$0xff]
    %v57 = vld [vmem:[#allocation5 + $0x70] sm:$0xff]
    %v58 = vld [vmem:[#allocation5 + $0x78] sm:$0xff]
    %59 = vmatpush.msra.mxu0 %v58
    %60 = vmatpush.msra.mxu0 %v57
    %61 = vmatpush.msra.mxu0 %v56
    %62 = vmatpush.msra.mxu0 %v55
    %63 = vmatpush.msra.mxu0 %v54
    %64 = vmatpush.msra.mxu0 %v53
    %65 = vmatpush.msra.mxu0 %v52
    %66 = vmatpush.msra.mxu0 %v51
    %67 = vmatpush.msra.mxu0 %v50
    %68 = vmatpush.msra.mxu0 %v49
    %69 = vmatpush.msra.mxu0 %v48
    %70 = vmatpush.msra.mxu0 %v47
    %71 = vmatpush.msra.mxu0 %v46
    %72 = vmatpush.msra.mxu0 %v45
    %73 = vmatpush.msra.mxu0 %v44
    %74 = vmatpush.msra.mxu0 %v43
    %75 = vmatmul.f32.gmra.mxu0 %v42
    %v76 = vpop.f32.mrf.mxu0
    %v77 = vadd.f32 0.0, %v76
    %78 = vdwg.mxu0
    %79 = vst [vmem:[#allocation7] sm:$0xff] %v77
    // Predicated region
    $region18: #{tpu_custom_call.1} parent=1 // pred_check
      _
    $region19: #{tpu_custom_call.1} parent=1 // pred_check_branch
      %81 = sbr.rel (0) target = $region21
    $region20: #{tpu_custom_call.1} parent=1 // pred_region
      %83 = vsyncadd [#allocation4], 0
      %s85 = sshll.u32 [#allocation7], 4
      %s86 = int_to_ptr.vmem [resolvable:$true] %s85
      %s87 = sshll.u32 %s2, 4
      %s88 = int_to_ptr.hbm [resolvable:$true] %s87
      %90 = dma.vmem_to_hbm [thread:$0]  %s86, 128, %s88, [#allocation4]
    $region21: #{tpu_custom_call.1} parent=1 // pred_fallthru
      _
    // Predicated region
    $region22: #{tpu_custom_call.1} parent=1 // pred_check
      _
    $region23: #{tpu_custom_call.1} parent=1 // pred_check_branch
      %92 = sbr.rel (0) target = $region25
    $region24: #{tpu_custom_call.1} parent=1 // pred_region
      %94 = dma.done [#allocation4], 128
    $region25: #{tpu_custom_call.1} parent=1 // pred_fallthru
      _
    %95 = vsyncpa [#allocation3], 1
    %96 = vsyncpa [#allocation6], 1
    %97 = vsyncpa [#allocation4], 1

</llo_original>
